<compile_context>
chip_gen: v7x
topology: tpu7x:2x2x1
jax: 0.10.0
libtpu: 0.0.40
codegen_flags: <defaults>
</compile_context>

<pallas_src>
import jax
import jax.numpy as jnp
from jax.experimental import pallas as pl
from jax.experimental.pallas import tpu as pltpu


_TARGET_TILE_BYTES = 1 << 20  # ~1 MiB per x tile (per input; output is same size)


def _implicit_m_kernel(scale_ref, x_ref, o_ref):
    # scale_ref: (tile_r, 1) per-(batch, channel) scale, broadcast over lanes.
    # x_ref, o_ref: (tile_r, tile_c) tiles.
    o_ref[...] = x_ref[...] * scale_ref[...]


def _choose_tiles(rows: int, cols: int, itemsize: int) -> tuple[int, int]:
    """Pick (tile_r, tile_c) obeying the (sublane, 128) block rules, ~1 MiB/tile."""
    sublane = max(8, 32 // itemsize)  # 8 for f32, 16 for bf16, 32 for int8

    # Column tile: keep lanes dense.  Tile only when cols is large AND a
    # multiple of 128; otherwise take the full axis (always legal).
    if cols > 2048 and cols % 128 == 0:
        tile_c = 2048
    else:
        tile_c = cols

    # Row tile: aim for ~1 MiB per x tile, rounded to the sublane packing.
    tile_r = max(sublane, _TARGET_TILE_BYTES // max(tile_c * itemsize, 1))
    tile_r = (tile_r // sublane) * sublane
    if tile_r >= rows:
        tile_r = rows  # full axis: block == array dim is always legal
    return tile_r, tile_c


def implicit_m(x: jax.Array, implicit: jax.Array) -> jax.Array:
    """Apply ImplicitM: y = implicit * x, with x NCHW and implicit (1, C, 1, 1)."""
    B, C, H, W = x.shape
    rows, cols = B * C, H * W
    itemsize = jnp.dtype(x.dtype).itemsize
    tile_r, tile_c = _choose_tiles(rows, cols, itemsize)

    # Glue (plain JAX): flatten NCHW -> (B*C, H*W); replicate channel scale per
    # batch (tiny: B*C elements).
    x2 = x.reshape(rows, cols)
    scale = jnp.broadcast_to(implicit.reshape(1, C), (B, C)).reshape(rows, 1)
    scale = scale.astype(x.dtype)

    grid = (pl.cdiv(rows, tile_r), pl.cdiv(cols, tile_c))

    cost = pl.CostEstimate(
        flops=rows * cols,
        transcendentals=0,
        bytes_accessed=(2 * rows * cols + rows) * itemsize,
    )

    out2 = pl.pallas_call(
        _implicit_m_kernel,
        out_shape=jax.ShapeDtypeStruct((rows, cols), x.dtype),
        grid_spec=pl.GridSpec(
            grid=grid,
            in_specs=[
                pl.BlockSpec((tile_r, 1), lambda i, j: (i, 0)),       # per-row scale
                pl.BlockSpec((tile_r, tile_c), lambda i, j: (i, j)),  # data tile
            ],
            out_specs=pl.BlockSpec((tile_r, tile_c), lambda i, j: (i, j)),
        ),
        compiler_params=pltpu.CompilerParams(
            dimension_semantics=("parallel", "parallel"),
        ),
        cost_estimate=cost,
    )(scale, x2)

    return out2.reshape(B, C, H, W)


if __name__ == "__main__":
    mean, std = 1.0, 0.02
    key = jax.random.PRNGKey(0)

    # --- Small shape consistent with the module's forward (NCHW input). ---
    B, C, H, W = 2, 4, 16, 16
    k_x, k_w, k_x2, k_w2 = jax.random.split(key, 4)

    x = jax.random.normal(k_x, (B, C, H, W), dtype=jnp.float32)
    # Deterministic parameter init matching nn.init.normal_(mean=1.0, std=0.02).
    implicit = mean + std * jax.random.normal(k_w, (1, C, 1, 1), dtype=jnp.float32)

    y = jax.block_until_ready(implicit_m(x, implicit))
    y_ref = implicit * x
    assert y.shape == (B, C, H, W)
    assert jnp.allclose(y, y_ref, atol=1e-6, rtol=1e-6), "mismatch vs reference (small)"

    # --- Slightly larger shape to exercise the multi-tile (pipelined) path. ---
    B2, C2, H2, W2 = 4, 128, 24, 24  # rows=512 > row tile -> 2 row blocks, padded tail
    x_big = jax.random.normal(k_x2, (B2, C2, H2, W2), dtype=jnp.float32)
    implicit_big = mean + std * jax.random.normal(k_w2, (1, C2, 1, 1), dtype=jnp.float32)

    y_big = jax.block_until_ready(implicit_m(x_big, implicit_big))
    y_big_ref = implicit_big * x_big
    assert jnp.allclose(y_big, y_big_ref, atol=1e-6, rtol=1e-6), "mismatch vs reference (tiled)"

    print("KERNEL_OK")
</pallas_src>

<mosaic_0001>
module attributes {stable_mosaic.version = 11 : i64} {
  func.func @_implicit_m_kernel(%arg0: i32, %arg1: i32, %arg2: memref<8x1xf32, #tpu.memory_space<vmem>>, %arg3: memref<8x256xf32, #tpu.memory_space<vmem>>, %arg4: memref<8x256xf32, #tpu.memory_space<vmem>>) attributes {dimension_semantics = [#tpu.dimension_semantics<parallel>, #tpu.dimension_semantics<parallel>], iteration_bounds = array<i64: 1, 1>, scalar_prefetch = 0 : i64, scratch_operands = 0 : i64, tpu.core_type = #tpu.core_type<tc>, window_params = [{transform_indices = @transform_0, window_bounds = array<i64: 8, 1>}, {transform_indices = @transform_1, window_bounds = array<i64: 8, 256>}, {transform_indices = @transform_2, window_bounds = array<i64: 8, 256>}]} {
    %c0 = arith.constant 0 : index
    %c0_0 = arith.constant 0 : index
    %0 = vector.load %arg3[%c0, %c0_0] : memref<8x256xf32, #tpu.memory_space<vmem>>, vector<8x256xf32>
    %c0_1 = arith.constant 0 : index
    %c0_2 = arith.constant 0 : index
    %1 = vector.load %arg2[%c0_1, %c0_2] : memref<8x1xf32, #tpu.memory_space<vmem>>, vector<8x1xf32>
    %2 = vector.broadcast %1 : vector<8x1xf32> to vector<8x256xf32>
    %3 = arith.mulf %0, %2 : vector<8x256xf32>
    %c0_3 = arith.constant 0 : index
    %c0_4 = arith.constant 0 : index
    %4 = vector.load %arg4[%c0_3, %c0_4] : memref<8x256xf32, #tpu.memory_space<vmem>>, vector<8x256xf32>
    tpu.vector_store %arg4[%c0_3, %c0_4], %3 {strides = array<i32>} : memref<8x256xf32, #tpu.memory_space<vmem>>, vector<8x256xf32>,
    return
  }
  func.func @transform_0(%arg0: i32, %arg1: i32) -> (i32, i32) {
    %c0_i32 = arith.constant 0 : i32
    %c0_i32_0 = arith.constant 0 : i32
    return %arg0, %c0_i32 : i32, i32
  }
  func.func @transform_1(%arg0: i32, %arg1: i32) -> (i32, i32) {
    %c0_i32 = arith.constant 0 : i32
    return %arg0, %arg1 : i32, i32
  }
  func.func @transform_2(%arg0: i32, %arg1: i32) -> (i32, i32) {
    %c0_i32 = arith.constant 0 : i32
    return %arg0, %arg1 : i32, i32
  }
}

</mosaic_0001>

<llo_original>
// kernel: tpu_custom_call.1
$region0: #{tpu_custom_call.1}
  #allocation0 [shape = 'u32[]', space=smem, size = 0x4, offset = 0x4, fixed_abs, tag = 'smem constant byte address 0x4 - core index']
  #allocation1 [shape = 'u32[144,128]{1,0:T(1,128)}', space=vmem, size = 0x12000, scoped, tag = 'internal scratch']
  %s0 = inlined_call_operand.vmem [shape: f32[8,1], index: 0, kind: input, shape index: {}]
  %s1 = inlined_call_operand.hbm [shape: f32[8,256], index: 1, kind: input, shape index: {}]
  %s2 = inlined_call_operand.hbm [shape: f32[8,256], index: 2, kind: output, shape index: {}]
  %s3 = sld [smem:[#allocation0]]
  $region22: #{tpu_custom_call.1} parent=0
    _
  %s5 = ssub.s32 1, %s3
  %s6 = scalar_select 0, %s5, %s3
  $region1: #{tpu_custom_call.1} parent=0
    #allocation2 [shape = 'u8[8192]{0}', space=vmem, size = 0x2000, scoped, tag = 'input window, operand 1, single buffered']
    #allocation3 [shape = 's32[1]{0}', space=sflag, size = 0x4, scoped, tag = 'scoped memory for tpu_custom_call.1']
    #allocation4 [shape = 's32[1]{0}', space=sflag, size = 0x4, scoped, tag = 'scoped memory for tpu_custom_call.1']
    #allocation5 [shape = 'u8[8192]{0}', space=vmem, size = 0x2000, scoped, tag = 'output window, operand 0, single buffered']
    %7 = vsyncpa [#allocation3], 0
    %8 = vsyncpa [#allocation4], 0
    // Predicated region
    $region2: #{tpu_custom_call.1} parent=1 // pred_check
      _
    $region3: #{tpu_custom_call.1} parent=1 // pred_check_branch
      %10 = sbr.rel (0) target = $region5
    $region4: #{tpu_custom_call.1} parent=1 // pred_region
      _
    $region5: #{tpu_custom_call.1} parent=1 // pred_fallthru
      _
    // Predicated region
    $region6: #{tpu_custom_call.1} parent=1 // pred_check
      _
    $region7: #{tpu_custom_call.1} parent=1 // pred_check_branch
      %12 = sbr.rel (0) target = $region9
    $region8: #{tpu_custom_call.1} parent=1 // pred_region
      %s14 = ssub.s32 256, 256
      %15 = vsyncadd [#allocation3], %s14
      %s17 = sshll.u32 [#allocation2], 4
      %s18 = int_to_ptr.vmem [resolvable:$true] %s17
      %20 = dma.hbm_to_vmem [thread:$0]  %s1, 256, %s18, [#allocation3]
    $region9: #{tpu_custom_call.1} parent=1 // pred_fallthru
      _
    // Predicated region
    $region10: #{tpu_custom_call.1} parent=1 // pred_check
      _
    $region11: #{tpu_custom_call.1} parent=1 // pred_check_branch
      %22 = sbr.rel (0) target = $region13
    $region12: #{tpu_custom_call.1} parent=1 // pred_region
      %23 = dma.done [#allocation3], 256
    $region13: #{tpu_custom_call.1} parent=1 // pred_fallthru
      _
    %v24 = vld [vmem:[#allocation2] sm:$0xff]
    %v25 = vld [vmem:[#allocation2 + $0x8] sm:$0xff]
    %v26 = vld [vmem:[%s0] sm:$0xff]
    %28 = vset.pattern.permute.xlu0 0
    %29 = vperm.xlu0 %28, %v26
    %v30 = vpop.permute.xlu0 %29
    %v32 = vmul.f32 %v24, %v30
    %v33 = vmul.f32 %v25, %v30
    %34 = vst [vmem:[#allocation5] sm:$0xff] %v32
    %35 = vst [vmem:[#allocation5 + $0x8] sm:$0xff] %v33
    // Predicated region
    $region14: #{tpu_custom_call.1} parent=1 // pred_check
      _
    $region15: #{tpu_custom_call.1} parent=1 // pred_check_branch
      %37 = sbr.rel (0) target = $region17
    $region16: #{tpu_custom_call.1} parent=1 // pred_region
      %s39 = ssub.s32 256, 256
      %40 = vsyncadd [#allocation4], %s39
      %s42 = sshll.u32 [#allocation5], 4
      %s43 = int_to_ptr.vmem [resolvable:$true] %s42
      %45 = dma.vmem_to_hbm [thread:$0]  %s43, 256, %s2, [#allocation4]
    $region17: #{tpu_custom_call.1} parent=1 // pred_fallthru
      _
    // Predicated region
    $region18: #{tpu_custom_call.1} parent=1 // pred_check
      _
    $region19: #{tpu_custom_call.1} parent=1 // pred_check_branch
      %47 = sbr.rel (0) target = $region21
    $region20: #{tpu_custom_call.1} parent=1 // pred_region
      %48 = dma.done [#allocation4], 256
    $region21: #{tpu_custom_call.1} parent=1 // pred_fallthru
      _
    %49 = vsyncpa [#allocation3], 1
    %50 = vsyncpa [#allocation4], 1

</llo_original>
